<compile_context>
chip_gen: v7x
topology: tpu7x:2x2x1
jax: 0.10.0
libtpu: 0.0.40
codegen_flags: <defaults>
</compile_context>

<pallas_src>
import jax
import jax.numpy as jnp
from jax.experimental import pallas as pl
from jax.experimental.pallas import tpu as pltpu


def _round_up(x, m):
    return (x + m - 1) // m * m


# -----------------------------------------------------------------------------
# Kernel
# -----------------------------------------------------------------------------
def _atcnn_kernel(
    ipt_ref,    # (TB, input_dim)         f32
    cond_ref,   # (TB, cond_dim)          f32  (cast to bf16 in-register)
    w1_ref,     # (cond_dim, 64)          bf16, BN1 folded
    w2_ref,     # (64, cond_out_dim)      f32,  BN2 folded
    wtc_ref,    # (input_dim, out_dim)    f32,  Wt^T @ Wc_target folded
    wcc_ref,    # (cond_out_dim, out_dim) f32,  Wc_condition
    bias_ref,   # (2, 128)                f32,  row0=b1' (64), row1=b2' (cond_out)
    out_ref,    # (TB, out_dim)           f32
):
    hidden = w1_ref.shape[1]
    cond_out_dim = w2_ref.shape[1]

    bias = bias_ref[...]
    b1 = bias[0:1, :hidden]            # (1, 64)
    b2 = bias[1:2, :cond_out_dim]      # (1, cond_out_dim)

    # --- condition branch, layer 1: Linear+BN folded -> dot + bias + ReLU ---
    # cond stays f32 in HBM; the bf16 cast rides in VPU slack and feeds the MXU
    # at full bf16 rate (important on v5e where f32 matmul would be the limiter).
    cond_bf16 = cond_ref[...].astype(jnp.bfloat16)
    h = jnp.dot(cond_bf16, w1_ref[...], preferred_element_type=jnp.float32)
    h = jnp.maximum(h + b1, 0.0)

    # --- condition branch, layer 2: Linear+BN folded ---
    c = jnp.dot(h, w2_ref[...], preferred_element_type=jnp.float32)
    c = jnp.maximum(c + b2, 0.0)

    # --- combiner: logits = ipt @ (Wt^T Wc_t) + c @ Wc_c, then Softmax(dim=1) ---
    logits = (
        jnp.dot(ipt_ref[...], wtc_ref[...], preferred_element_type=jnp.float32)
        + jnp.dot(c, wcc_ref[...], preferred_element_type=jnp.float32)
    )
    m = jnp.max(logits, axis=1, keepdims=True)
    e = jnp.exp(logits - m)
    # Exact normalization: kernel is HBM-bound, so this is hidden under the DMA.
    inv = pl.reciprocal(jnp.sum(e, axis=1, keepdims=True), approx=False)
    out_ref[...] = e * inv


# -----------------------------------------------------------------------------
# Host-side parameter folding (done once, outside the kernel)
# -----------------------------------------------------------------------------
def make_raw_params(key, input_dim=6, cond_dim=300, cond_out_dim=6, output_dim=5):
    """Synthetic parameters in PyTorch layout: Linear weights are (out, in)."""
    ks = jax.random.split(key, 12)

    def n(k, shape, s=0.1):
        return s * jax.random.normal(k, shape, jnp.float32)

    return dict(
        wt=n(ks[0], (input_dim, input_dim)),                 # target (no bias)
        w1=n(ks[1], (64, cond_dim)),
        b1=n(ks[2], (64,)),
        g1=1.0 + n(ks[3], (64,)),
        be1=n(ks[4], (64,)),
        rm1=n(ks[5], (64,)),
        rv1=jnp.abs(1.0 + n(ks[6], (64,))),
        w2=n(ks[7], (cond_out_dim, 64)),
        b2=n(ks[8], (cond_out_dim,)),
        g2=1.0 + n(ks[9], (cond_out_dim,)),
        be2=n(ks[10], (cond_out_dim,)),
        rm2=jnp.zeros((cond_out_dim,), jnp.float32),
        rv2=jnp.ones((cond_out_dim,), jnp.float32),
        wc=n(ks[11], (output_dim, cond_out_dim + input_dim)),  # combiner (no bias)
    )


def fold_params(raw, eps=1e-5):
    """Fold BN (eval mode) and the linear target path into kernel-ready tensors."""
    # BN1 fold: y*s + sh  ==  x @ (W^T * s) + (b*s + sh)
    s1 = raw["g1"] / jnp.sqrt(raw["rv1"] + eps)
    sh1 = raw["be1"] - raw["rm1"] * s1
    w1f = raw["w1"].T * s1[None, :]                 # (cond_dim, 64)
    b1f = raw["b1"] * s1 + sh1                      # (64,)

    s2 = raw["g2"] / jnp.sqrt(raw["rv2"] + eps)
    sh2 = raw["be2"] - raw["rm2"] * s2
    w2f = raw["w2"].T * s2[None, :]                 # (64, cond_out)
    b2f = raw["b2"] * s2 + sh2                      # (cond_out,)

    input_dim = raw["wt"].shape[0]
    hidden = w1f.shape[1]
    cond_out = w2f.shape[1]
    assert hidden <= 128 and cond_out <= 128

    # combiner split: forward concatenates (target_out, cond_out) along dim=1
    wc_t = raw["wc"][:, :input_dim].T               # (input_dim, out)
    wc_c = raw["wc"][:, input_dim:].T               # (cond_out, out)
    # no nonlinearity between target Linear and combiner -> fold the two matmuls
    wtc = raw["wt"].T @ wc_t                        # (input_dim, out)

    # pack the two small bias vectors into a single (2, 128) slab -> one DMA
    bias_pack = jnp.zeros((2, 128), jnp.float32)
    bias_pack = bias_pack.at[0, :hidden].set(b1f)
    bias_pack = bias_pack.at[1, :cond_out].set(b2f)

    return dict(
        w1=w1f.astype(jnp.bfloat16),                # (cond_dim, 64) bf16
        w2=w2f.astype(jnp.float32),
        wtc=wtc.astype(jnp.float32),
        wcc=wc_c.astype(jnp.float32),
        bias=bias_pack,
    )


# -----------------------------------------------------------------------------
# Wrapper
# -----------------------------------------------------------------------------
def atcnn_forward(ipt, cond, fp, *, max_tile_b=2048):
    B, input_dim = ipt.shape
    _, cond_dim = cond.shape
    hidden = fp["w1"].shape[1]
    cond_out = fp["w2"].shape[1]
    output_dim = fp["wtc"].shape[1]

    # Batch tile: multiple of 8, capped at max_tile_b; large batches are split
    # into >=4 programs so both v7x TensorCores get work (no-op on v5e/v6e).
    # No batch padding and no wrapper-side pad/cast of cond: Pallas masks the
    # ragged last block and all kernel compute is row-local.
    tb = min(max_tile_b, _round_up(pl.cdiv(B, 4), 8))
    grid = (pl.cdiv(B, tb),)

    flops = 2 * B * (cond_dim * hidden + hidden * cond_out
                     + input_dim * output_dim + cond_out * output_dim)
    transcendentals = B * (output_dim + 1)
    bytes_accessed = (
        B * (input_dim + cond_dim + output_dim) * 4
        + fp["w1"].size * 2
        + (fp["w2"].size + fp["wtc"].size + fp["wcc"].size + fp["bias"].size) * 4
    )

    return pl.pallas_call(
        _atcnn_kernel,
        out_shape=jax.ShapeDtypeStruct((B, output_dim), jnp.float32),
        grid=grid,
        in_specs=[
            pl.BlockSpec((tb, input_dim), lambda i: (i, 0)),
            pl.BlockSpec((tb, cond_dim), lambda i: (i, 0)),
            pl.BlockSpec(fp["w1"].shape, lambda i: (0, 0)),
            pl.BlockSpec(fp["w2"].shape, lambda i: (0, 0)),
            pl.BlockSpec(fp["wtc"].shape, lambda i: (0, 0)),
            pl.BlockSpec(fp["wcc"].shape, lambda i: (0, 0)),
            pl.BlockSpec(fp["bias"].shape, lambda i: (0, 0)),
        ],
        out_specs=pl.BlockSpec((tb, output_dim), lambda i: (i, 0)),
        compiler_params=pltpu.CompilerParams(
            dimension_semantics=("parallel",),
            vmem_limit_bytes=32 * 1024 * 1024,
        ),
        cost_estimate=pl.CostEstimate(
            flops=int(flops),
            transcendentals=int(transcendentals),
            bytes_accessed=int(bytes_accessed),
        ),
    )(ipt, cond, fp["w1"], fp["w2"], fp["wtc"], fp["wcc"], fp["bias"])


# -----------------------------------------------------------------------------
# Pure-JAX reference (PyTorch semantics, eval-mode BN), for correctness check
# -----------------------------------------------------------------------------
def atcnn_reference(ipt, cond, raw, eps=1e-5):
    def bn(x, g, b, m, v):
        return (x - m) / jnp.sqrt(v + eps) * g + b

    t = ipt @ raw["wt"].T
    h = cond @ raw["w1"].T + raw["b1"]
    h = jnp.maximum(bn(h, raw["g1"], raw["be1"], raw["rm1"], raw["rv1"]), 0.0)
    c = h @ raw["w2"].T + raw["b2"]
    c = jnp.maximum(bn(c, raw["g2"], raw["be2"], raw["rm2"], raw["rv2"]), 0.0)
    x = jnp.concatenate([t, c], axis=1)
    logits = x @ raw["wc"].T
    return jax.nn.softmax(logits, axis=1)


if __name__ == "__main__":
    input_dim, cond_dim, cond_out_dim, output_dim = 6, 300, 6, 5

    key = jax.random.PRNGKey(0)
    k_ipt, k_cond, k_raw = jax.random.split(key, 3)

    raw = make_raw_params(k_raw, input_dim, cond_dim, cond_out_dim, output_dim)
    fp = fold_params(raw)

    # Test 1: small batch (single tile).
    B = 8
    ipt = jax.random.normal(k_ipt, (B, input_dim), jnp.float32)
    cond = jax.random.normal(k_cond, (B, cond_dim), jnp.float32)

    out = atcnn_forward(ipt, cond, fp)
    out = jax.block_until_ready(out)

    assert out.shape == (B, output_dim)
    assert bool(jnp.all(jnp.isfinite(out)))
    assert jnp.allclose(jnp.sum(out, axis=1), 1.0, atol=1e-5)

    ref = atcnn_reference(ipt, cond, raw)
    assert jnp.allclose(out, ref, atol=3e-2, rtol=3e-2), float(
        jnp.max(jnp.abs(out - ref))
    )

    # Test 2: multi-tile grid with a ragged last block (no host-side padding).
    B2 = 100
    ipt2 = jax.random.normal(jax.random.PRNGKey(1), (B2, input_dim), jnp.float32)
    cond2 = jax.random.normal(jax.random.PRNGKey(2), (B2, cond_dim), jnp.float32)

    out2 = jax.block_until_ready(atcnn_forward(ipt2, cond2, fp))
    assert out2.shape == (B2, output_dim)
    assert bool(jnp.all(jnp.isfinite(out2)))
    assert jnp.allclose(jnp.sum(out2, axis=1), 1.0, atol=1e-5)

    ref2 = atcnn_reference(ipt2, cond2, raw)
    assert jnp.allclose(out2, ref2, atol=3e-2, rtol=3e-2), float(
        jnp.max(jnp.abs(out2 - ref2))
    )

    print("KERNEL_OK")
</pallas_src>

<mosaic_0001>
module attributes {stable_mosaic.version = 11 : i64} {
  func.func @_atcnn_kernel(%arg0: i32, %arg1: memref<8x6xf32, #tpu.memory_space<vmem>>, %arg2: memref<8x300xf32, #tpu.memory_space<vmem>>, %arg3: memref<300x64xbf16, #tpu.memory_space<vmem>>, %arg4: memref<64x6xf32, #tpu.memory_space<vmem>>, %arg5: memref<6x5xf32, #tpu.memory_space<vmem>>, %arg6: memref<6x5xf32, #tpu.memory_space<vmem>>, %arg7: memref<2x128xf32, #tpu.memory_space<vmem>>, %arg8: memref<8x5xf32, #tpu.memory_space<vmem>>) attributes {dimension_semantics = [#tpu.dimension_semantics<parallel>], iteration_bounds = array<i64: 1>, scalar_prefetch = 0 : i64, scratch_operands = 0 : i64, tpu.core_type = #tpu.core_type<tc>, window_params = [{transform_indices = @transform_0, window_bounds = array<i64: 8, 6>}, {transform_indices = @transform_1, window_bounds = array<i64: 8, 300>}, {pipeline_mode = #tpu.pipeline_mode<synchronous>, transform_indices = @transform_2, window_bounds = array<i64: 300, 64>}, {pipeline_mode = #tpu.pipeline_mode<synchronous>, transform_indices = @transform_3, window_bounds = array<i64: 64, 6>}, {pipeline_mode = #tpu.pipeline_mode<synchronous>, transform_indices = @transform_4, window_bounds = array<i64: 6, 5>}, {pipeline_mode = #tpu.pipeline_mode<synchronous>, transform_indices = @transform_5, window_bounds = array<i64: 6, 5>}, {pipeline_mode = #tpu.pipeline_mode<synchronous>, transform_indices = @transform_6, window_bounds = array<i64: 2, 128>}, {transform_indices = @transform_7, window_bounds = array<i64: 8, 5>}]} {
    %c0 = arith.constant 0 : index
    %c0_0 = arith.constant 0 : index
    %0 = vector.load %arg7[%c0, %c0_0] : memref<2x128xf32, #tpu.memory_space<vmem>>, vector<2x128xf32>
    %1 = vector.extract_strided_slice %0 {offsets = [0, 0], sizes = [1, 64], strides = [1, 1]} : vector<2x128xf32> to vector<1x64xf32>
    %2 = vector.extract_strided_slice %0 {offsets = [1, 0], sizes = [1, 6], strides = [1, 1]} : vector<2x128xf32> to vector<1x6xf32>
    %c0_1 = arith.constant 0 : index
    %c0_2 = arith.constant 0 : index
    %3 = vector.load %arg2[%c0_1, %c0_2] : memref<8x300xf32, #tpu.memory_space<vmem>>, vector<8x300xf32>
    %4 = arith.truncf %3 : vector<8x300xf32> to vector<8x300xbf16>
    %c0_3 = arith.constant 0 : index
    %c0_4 = arith.constant 0 : index
    %5 = vector.load %arg3[%c0_3, %c0_4] : memref<300x64xbf16, #tpu.memory_space<vmem>>, vector<300x64xbf16>
    %cst = arith.constant dense<0.000000e+00> : vector<8x64xf32>
    %6 = tpu.matmul %4, %5, %cst {dimension_numbers = #tpu.dot_dimension_numbers<[1], [0], [0], [1], [0, 0, 1, 1], [], []>} : vector<8x300xbf16>, vector<300x64xbf16>, vector<8x64xf32> -> vector<8x64xf32>
    %7 = vector.broadcast %1 : vector<1x64xf32> to vector<8x64xf32>
    %8 = arith.addf %6, %7 : vector<8x64xf32>
    %cst_5 = arith.constant 0.000000e+00 : f32
    %9 = vector.broadcast %cst_5 : f32 to vector<8x64xf32>
    %10 = arith.maximumf %8, %9 : vector<8x64xf32>
    %c0_6 = arith.constant 0 : index
    %c0_7 = arith.constant 0 : index
    %11 = vector.load %arg4[%c0_6, %c0_7] : memref<64x6xf32, #tpu.memory_space<vmem>>, vector<64x6xf32>
    %cst_8 = arith.constant dense<0.000000e+00> : vector<8x6xf32>
    %12 = tpu.matmul %10, %11, %cst_8 {dimension_numbers = #tpu.dot_dimension_numbers<[1], [0], [0], [1], [0, 0, 1, 1], [], []>} : vector<8x64xf32>, vector<64x6xf32>, vector<8x6xf32> -> vector<8x6xf32>
    %13 = vector.broadcast %2 : vector<1x6xf32> to vector<8x6xf32>
    %14 = arith.addf %12, %13 : vector<8x6xf32>
    %cst_9 = arith.constant 0.000000e+00 : f32
    %15 = vector.broadcast %cst_9 : f32 to vector<8x6xf32>
    %16 = arith.maximumf %14, %15 : vector<8x6xf32>
    %c0_10 = arith.constant 0 : index
    %c0_11 = arith.constant 0 : index
    %17 = vector.load %arg1[%c0_10, %c0_11] : memref<8x6xf32, #tpu.memory_space<vmem>>, vector<8x6xf32>
    %c0_12 = arith.constant 0 : index
    %c0_13 = arith.constant 0 : index
    %18 = vector.load %arg5[%c0_12, %c0_13] : memref<6x5xf32, #tpu.memory_space<vmem>>, vector<6x5xf32>
    %cst_14 = arith.constant dense<0.000000e+00> : vector<8x5xf32>
    %19 = tpu.matmul %17, %18, %cst_14 {dimension_numbers = #tpu.dot_dimension_numbers<[1], [0], [0], [1], [0, 0, 1, 1], [], []>} : vector<8x6xf32>, vector<6x5xf32>, vector<8x5xf32> -> vector<8x5xf32>
    %c0_15 = arith.constant 0 : index
    %c0_16 = arith.constant 0 : index
    %20 = vector.load %arg6[%c0_15, %c0_16] : memref<6x5xf32, #tpu.memory_space<vmem>>, vector<6x5xf32>
    %cst_17 = arith.constant dense<0.000000e+00> : vector<8x5xf32>
    %21 = tpu.matmul %16, %20, %cst_17 {dimension_numbers = #tpu.dot_dimension_numbers<[1], [0], [0], [1], [0, 0, 1, 1], [], []>} : vector<8x6xf32>, vector<6x5xf32>, vector<8x5xf32> -> vector<8x5xf32>
    %22 = arith.addf %19, %21 : vector<8x5xf32>
    %cst_18 = arith.constant dense<0xFF800000> : vector<8xf32>
    %23 = vector.multi_reduction <maximumf>, %22, %cst_18 [1] : vector<8x5xf32> to vector<8xf32>
    %24 = vector.shape_cast %23 : vector<8xf32> to vector<8x1xf32>
    %25 = vector.broadcast %24 : vector<8x1xf32> to vector<8x5xf32>
    %26 = arith.subf %22, %25 : vector<8x5xf32>
    %27 = math.exp %26 : vector<8x5xf32>
    %cst_19 = arith.constant dense<0.000000e+00> : vector<8xf32>
    %28 = vector.multi_reduction <add>, %27, %cst_19 [1] : vector<8x5xf32> to vector<8xf32>
    %29 = vector.shape_cast %28 : vector<8xf32> to vector<8x1xf32>
    %30 = tpu.reciprocal %29 : vector<8x1xf32> -> vector<8x1xf32>
    %31 = vector.broadcast %30 : vector<8x1xf32> to vector<8x5xf32>
    %32 = arith.mulf %27, %31 : vector<8x5xf32>
    %c0_20 = arith.constant 0 : index
    %c0_21 = arith.constant 0 : index
    %33 = vector.load %arg8[%c0_20, %c0_21] : memref<8x5xf32, #tpu.memory_space<vmem>>, vector<8x5xf32>
    tpu.vector_store %arg8[%c0_20, %c0_21], %32 {strides = array<i32>} : memref<8x5xf32, #tpu.memory_space<vmem>>, vector<8x5xf32>,
    return
  }
  func.func @transform_0(%arg0: i32) -> (i32, i32) {
    %c0_i32 = arith.constant 0 : i32
    %c0_i32_0 = arith.constant 0 : i32
    return %arg0, %c0_i32 : i32, i32
  }
  func.func @transform_1(%arg0: i32) -> (i32, i32) {
    %c0_i32 = arith.constant 0 : i32
    %c0_i32_0 = arith.constant 0 : i32
    return %arg0, %c0_i32 : i32, i32
  }
  func.func @transform_2(%arg0: i32) -> (i32, i32) {
    %c0_i32 = arith.constant 0 : i32
    %c0_i32_0 = arith.constant 0 : i32
    %c0_i32_1 = arith.constant 0 : i32
    return %c0_i32, %c0_i32_0 : i32, i32
  }
  func.func @transform_3(%arg0: i32) -> (i32, i32) {
    %c0_i32 = arith.constant 0 : i32
    %c0_i32_0 = arith.constant 0 : i32
    %c0_i32_1 = arith.constant 0 : i32
    return %c0_i32, %c0_i32_0 : i32, i32
  }
  func.func @transform_4(%arg0: i32) -> (i32, i32) {
    %c0_i32 = arith.constant 0 : i32
    %c0_i32_0 = arith.constant 0 : i32
    %c0_i32_1 = arith.constant 0 : i32
    return %c0_i32, %c0_i32_0 : i32, i32
  }
  func.func @transform_5(%arg0: i32) -> (i32, i32) {
    %c0_i32 = arith.constant 0 : i32
    %c0_i32_0 = arith.constant 0 : i32
    %c0_i32_1 = arith.constant 0 : i32
    return %c0_i32, %c0_i32_0 : i32, i32
  }
  func.func @transform_6(%arg0: i32) -> (i32, i32) {
    %c0_i32 = arith.constant 0 : i32
    %c0_i32_0 = arith.constant 0 : i32
    %c0_i32_1 = arith.constant 0 : i32
    return %c0_i32, %c0_i32_0 : i32, i32
  }
  func.func @transform_7(%arg0: i32) -> (i32, i32) {
    %c0_i32 = arith.constant 0 : i32
    %c0_i32_0 = arith.constant 0 : i32
    return %arg0, %c0_i32 : i32, i32
  }
}

</mosaic_0001>

<llo_original>
// kernel: tpu_custom_call.1
$region0: #{tpu_custom_call.1}
  #allocation0 [shape = 'u32[]', space=smem, size = 0x4, offset = 0x4, fixed_abs, tag = 'smem constant byte address 0x4 - core index']
  #allocation1 [shape = 'u32[144,128]{1,0:T(1,128)}', space=vmem, size = 0x12000, scoped, tag = 'internal scratch']
  %s0 = inlined_call_operand.vmem [shape: f32[8,6], index: 0, kind: input, shape index: {}]
  %s1 = inlined_call_operand.vmem [shape: f32[8,300], index: 1, kind: input, shape index: {}]
  %s2 = inlined_call_operand.vmem [shape: bf16[300,64], index: 2, kind: input, shape index: {}]
  %s3 = inlined_call_operand.vmem [shape: f32[64,6], index: 3, kind: input, shape index: {}]
  %s4 = inlined_call_operand.vmem [shape: f32[6,5], index: 4, kind: input, shape index: {}]
  %s5 = inlined_call_operand.vmem [shape: f32[6,5], index: 5, kind: input, shape index: {}]
  %s6 = inlined_call_operand.vmem [shape: f32[2,128], index: 6, kind: input, shape index: {}]
  %s7 = inlined_call_operand.hbm [shape: f32[8,5], index: 7, kind: output, shape index: {}]
  %s8 = sld [smem:[#allocation0]]
  $region38: #{tpu_custom_call.1} parent=0
    _
  %s10 = ssub.s32 1, %s8
  %s11 = scalar_select 0, %s10, %s8
  $region1: #{tpu_custom_call.1} parent=0
    #allocation2 [shape = 'u8[4096]{0}', space=vmem, size = 0x1000, scoped, tag = 'output window, operand 0, single buffered']
    #allocation3 [shape = 's32[1]{0}', space=sflag, size = 0x4, scoped, tag = 'scoped memory for tpu_custom_call.1']
    %12 = vsyncpa [#allocation3], 0
    // Predicated region
    $region2: #{tpu_custom_call.1} parent=1 // pred_check
      _
    $region3: #{tpu_custom_call.1} parent=1 // pred_check_branch
      %14 = sbr.rel (0) target = $region5
    $region4: #{tpu_custom_call.1} parent=1 // pred_region
      _
    $region5: #{tpu_custom_call.1} parent=1 // pred_fallthru
      _
    // Predicated region
    $region6: #{tpu_custom_call.1} parent=1 // pred_check
      _
    $region7: #{tpu_custom_call.1} parent=1 // pred_check_branch
      %16 = sbr.rel (0) target = $region9
    $region8: #{tpu_custom_call.1} parent=1 // pred_region
      _
    $region9: #{tpu_custom_call.1} parent=1 // pred_fallthru
      _
    // Predicated region
    $region10: #{tpu_custom_call.1} parent=1 // pred_check
      _
    $region11: #{tpu_custom_call.1} parent=1 // pred_check_branch
      %18 = sbr.rel (0) target = $region13
    $region12: #{tpu_custom_call.1} parent=1 // pred_region
      _
    $region13: #{tpu_custom_call.1} parent=1 // pred_fallthru
      _
    // Predicated region
    $region14: #{tpu_custom_call.1} parent=1 // pred_check
      _
    $region15: #{tpu_custom_call.1} parent=1 // pred_check_branch
      %20 = sbr.rel (0) target = $region17
    $region16: #{tpu_custom_call.1} parent=1 // pred_region
      _
    $region17: #{tpu_custom_call.1} parent=1 // pred_fallthru
      _
    // Predicated region
    $region18: #{tpu_custom_call.1} parent=1 // pred_check
      _
    $region19: #{tpu_custom_call.1} parent=1 // pred_check_branch
      %22 = sbr.rel (0) target = $region21
    $region20: #{tpu_custom_call.1} parent=1 // pred_region
      _
    $region21: #{tpu_custom_call.1} parent=1 // pred_fallthru
      _
    // Predicated region
    $region22: #{tpu_custom_call.1} parent=1 // pred_check
      _
    $region23: #{tpu_custom_call.1} parent=1 // pred_check_branch
      %24 = sbr.rel (0) target = $region25
    $region24: #{tpu_custom_call.1} parent=1 // pred_region
      _
    $region25: #{tpu_custom_call.1} parent=1 // pred_fallthru
      _
    // Predicated region
    $region26: #{tpu_custom_call.1} parent=1 // pred_check
      _
    $region27: #{tpu_custom_call.1} parent=1 // pred_check_branch
      %26 = sbr.rel (0) target = $region29
    $region28: #{tpu_custom_call.1} parent=1 // pred_region
      _
    $region29: #{tpu_custom_call.1} parent=1 // pred_fallthru
      _
    %v28 = vld [vmem:[%s6] sm:$0x3]
    %v29 = vld [vmem:[%s1] sm:$0xff]
    %v30 = vld [vmem:[%s1 + $0x8] sm:$0xff]
    %v31 = vld [vmem:[%s1 + $0x10] sm:$0xff]
    %v32 = vpack.c.bf16 %v29, %v29
    %v33 = vpack.c.bf16 %v30, %v30
    %v34 = vpack.c.bf16 %v31, %v31
    %v35 = vld [vmem:[%s2] sm:$0xf]
    %v36 = vld [vmem:[%s2 + $0x4] sm:$0xf]
    %v37 = vld [vmem:[%s2 + $0x8] sm:$0xf]
    %v38 = vld [vmem:[%s2 + $0xc] sm:$0xf]
    %v39 = vld [vmem:[%s2 + $0x10] sm:$0xf]
    %v40 = vld [vmem:[%s2 + $0x14] sm:$0xf]
    %v41 = vld [vmem:[%s2 + $0x18] sm:$0xf]
    %v42 = vld [vmem:[%s2 + $0x1c] sm:$0xf]
    %v43 = vld [vmem:[%s2 + $0x20] sm:$0xf]
    %v44 = vld [vmem:[%s2 + $0x24] sm:$0xf]
    %v45 = vld [vmem:[%s2 + $0x28] sm:$0xf]
    %v46 = vld [vmem:[%s2 + $0x2c] sm:$0xf]
    %v47 = vld [vmem:[%s2 + $0x30] sm:$0xf]
    %v48 = vld [vmem:[%s2 + $0x34] sm:$0xf]
    %v49 = vld [vmem:[%s2 + $0x38] sm:$0xf]
    %v50 = vld [vmem:[%s2 + $0x3c] sm:$0xf]
    %v51 = vld [vmem:[%s2 + $0x40] sm:$0xf]
    %v52 = vld [vmem:[%s2 + $0x44] sm:$0xf]
    %v53 = vld [vmem:[%s2 + $0x48] sm:$0xf]
    %v54 = vld [vmem:[%s2 + $0x4c] sm:$0xf]
    %v55 = vld [vmem:[%s2 + $0x50] sm:$0xf]
    %v56 = vld [vmem:[%s2 + $0x54] sm:$0xf]
    %v57 = vld [vmem:[%s2 + $0x58] sm:$0xf]
    %v58 = vld [vmem:[%s2 + $0x5c] sm:$0xf]
    %v59 = vld [vmem:[%s2 + $0x60] sm:$0xf]
    %v60 = vld [vmem:[%s2 + $0x64] sm:$0xf]
    %v61 = vld [vmem:[%s2 + $0x68] sm:$0xf]
    %v62 = vld [vmem:[%s2 + $0x6c] sm:$0xf]
    %v63 = vld [vmem:[%s2 + $0x70] sm:$0xf]
    %v64 = vld [vmem:[%s2 + $0x74] sm:$0xf]
    %v65 = vld [vmem:[%s2 + $0x78] sm:$0xf]
    %v66 = vld [vmem:[%s2 + $0x7c] sm:$0xf]
    %v67 = vld [vmem:[%s2 + $0x80] sm:$0xf]
    %v68 = vld [vmem:[%s2 + $0x84] sm:$0xf]
    %v69 = vld [vmem:[%s2 + $0x88] sm:$0xf]
    %v70 = vld [vmem:[%s2 + $0x8c] sm:$0xf]
    %v71 = vld [vmem:[%s2 + $0x90] sm:$0xf]
    %v72 = vld [vmem:[%s2 + $0x94] sm:$0x3]
    %v73 = vlaneseq
    %v74 = vshrl.u32 %v73, 7
    %v75 = vsub.s32 0, %v74
    %v76 = vrot.slane %v28, %v75
    %v115 = vunpack.c.l.b16 %v35
    %v116 = vunpack.c.l.b16 %v36
    %v117 = vunpack.c.l.b16 %v37
    %v118 = vunpack.c.l.b16 %v38
    %v119 = vunpack.c.l.b16 %v39
    %v120 = vunpack.c.l.b16 %v40
    %v121 = vunpack.c.l.b16 %v41
    %v122 = vunpack.c.l.b16 %v42
    %v123 = vunpack.c.l.b16 %v43
    %v124 = vunpack.c.l.b16 %v44
    %v125 = vunpack.c.l.b16 %v45
    %v126 = vunpack.c.l.b16 %v46
    %v127 = vunpack.c.l.b16 %v47
    %v128 = vunpack.c.l.b16 %v48
    %v129 = vunpack.c.l.b16 %v49
    %v130 = vunpack.c.l.b16 %v50
    %v131 = vunpack.c.l.b16 %v51
    %v132 = vunpack.c.l.b16 %v52
    %v133 = vunpack.c.l.b16 %v53
    %v134 = vunpack.c.l.b16 %v54
    %v135 = vunpack.c.l.b16 %v55
    %v136 = vunpack.c.l.b16 %v56
    %v137 = vunpack.c.l.b16 %v57
    %v138 = vunpack.c.l.b16 %v58
    %v139 = vunpack.c.l.b16 %v59
    %v140 = vunpack.c.l.b16 %v60
    %v141 = vunpack.c.l.b16 %v61
    %v142 = vunpack.c.l.b16 %v62
    %v143 = vunpack.c.l.b16 %v63
    %v144 = vunpack.c.l.b16 %v64
    %v145 = vunpack.c.l.b16 %v65
    %v146 = vunpack.c.l.b16 %v66
    %v147 = vunpack.c.l.b16 %v67
    %v148 = vunpack.c.l.b16 %v68
    %v149 = vunpack.c.l.b16 %v69
    %v150 = vunpack.c.l.b16 %v70
    %v151 = vunpack.c.l.b16 %v71
    %v152 = vunpack.c.l.b16 %v72
    %v153 = vpack.c.b16 %v116, %v115
    %v154 = vpack.c.b16 %v118, %v117
    %v155 = vpack.c.b16 %v120, %v119
    %v156 = vpack.c.b16 %v122, %v121
    %v157 = vpack.c.b16 %v124, %v123
    %v158 = vpack.c.b16 %v126, %v125
    %v159 = vpack.c.b16 %v128, %v127
    %v160 = vpack.c.b16 %v130, %v129
    %v161 = vpack.c.b16 %v132, %v131
    %v162 = vpack.c.b16 %v134, %v133
    %v163 = vpack.c.b16 %v136, %v135
    %v164 = vpack.c.b16 %v138, %v137
    %v165 = vpack.c.b16 %v140, %v139
    %v166 = vpack.c.b16 %v142, %v141
    %v167 = vpack.c.b16 %v144, %v143
    %v168 = vpack.c.b16 %v146, %v145
    %v169 = vpack.c.b16 %v148, %v147
    %v170 = vpack.c.b16 %v150, %v149
    %v171 = vpack.c.b16 %v152, %v151
    %vm190 = vcmask 359424
    %v192 = vsel %vm190, %v34, 0
    %vm194 = vcmask 1045504
    %v196 = vsel %vm194, %v171, 0
    %198 = vmatprep.subr.bf16.mxu0 0
    %199 = vmatpush1.bf16.msra.mxu0 %v153
    %200 = vmatprep.subr.bf16.mxu0 0
    %201 = vmatpush1.bf16.msra.mxu0 %v154
    %202 = vmatprep.subr.bf16.mxu0 0
    %203 = vmatpush1.bf16.msra.mxu0 %v155
    %204 = vmatprep.subr.bf16.mxu0 0
    %205 = vmatpush1.bf16.msra.mxu0 %v156
    %206 = vmatprep.subr.bf16.mxu0 0
    %207 = vmatpush1.bf16.msra.mxu0 %v157
    %208 = vmatprep.subr.bf16.mxu0 0
    %209 = vmatpush1.bf16.msra.mxu0 %v158
    %210 = vmatprep.subr.bf16.mxu0 0
    %211 = vmatpush1.bf16.msra.mxu0 %v159
    %212 = vmatprep.subr.bf16.mxu0 0
    %213 = vmatpush1.bf16.msra.mxu0 %v160
    %214 = vmatprep.subr.bf16.mxu0 0
    %215 = vmatpush1.bf16.msra.mxu0 %v161
    %216 = vmatprep.subr.bf16.mxu0 0
    %217 = vmatpush1.bf16.msra.mxu0 %v162
    %218 = vmatprep.subr.bf16.mxu0 0
    %219 = vmatpush1.bf16.msra.mxu0 %v163
    %220 = vmatprep.subr.bf16.mxu0 0
    %221 = vmatpush1.bf16.msra.mxu0 %v164
    %222 = vmatprep.subr.bf16.mxu0 0
    %223 = vmatpush1.bf16.msra.mxu0 %v165
    %224 = vmatprep.subr.bf16.mxu0 0
    %225 = vmatpush1.bf16.msra.mxu0 %v166
    %226 = vmatprep.subr.bf16.mxu0 0
    %227 = vmatpush1.bf16.msra.mxu0 %v167
    %228 = vmatprep.subr.bf16.mxu0 0
    %229 = vmatpush1.bf16.msra.mxu0 %v168
    %230 = vmatprep.mubr.bf16.mxu0 %v33
    %231 = vmatmul.mubr.bf16.gmra.mrb[0].mxu0 %v32
    %v232 = vpop.f32.mrb[0].mxu0
    %v233 = vadd.f32 %v76, %v232
    %v234 = vpop.f32.mrb[0].mxu0
    %v235 = vpop.f32.mrb[0].mxu0
    %v236 = vpop.f32.mrb[0].mxu0
    %237 = vdwg.mxu0
    %238 = vmatprep.subr.bf16.mxu0 0
    %239 = vmatpush1.bf16.msra.mxu0 %v169
    %240 = vmatprep.subr.bf16.mxu0 0
    %241 = vmatpush1.bf16.msra.mxu0 %v170
    %242 = vmatprep.subr.bf16.mxu0 0
    %243 = vmatpush1.bf16.msra.mxu0 %v196
    %244 = vmatprep.subr.bf16.mxu0 0
    %245 = vmatpush1.bf16.msra.mxu0 0
    %246 = vmatprep.subr.bf16.mxu0 0
    %247 = vmatpush1.bf16.msra.mxu0 0
    %248 = vmatprep.subr.bf16.mxu0 0
    %249 = vmatpush1.bf16.msra.mxu0 0
    %250 = vmatprep.subr.bf16.mxu0 0
    %251 = vmatpush1.bf16.msra.mxu0 0
    %252 = vmatprep.subr.bf16.mxu0 0
    %253 = vmatpush1.bf16.msra.mxu0 0
    %254 = vmatprep.subr.bf16.mxu0 0
    %255 = vmatpush1.bf16.msra.mxu0 0
    %256 = vmatprep.subr.bf16.mxu0 0
    %257 = vmatpush1.bf16.msra.mxu0 0
    %258 = vmatprep.subr.bf16.mxu0 0
    %259 = vmatpush1.bf16.msra.mxu0 0
    %260 = vmatprep.subr.bf16.mxu0 0
    %261 = vmatpush1.bf16.msra.mxu0 0
    %262 = vmatprep.subr.bf16.mxu0 0
    %263 = vmatpush1.bf16.msra.mxu0 0
    %264 = vmatprep.subr.bf16.mxu0 0
    %265 = vmatpush1.bf16.msra.mxu0 0
    %266 = vmatprep.subr.bf16.mxu0 0
    %267 = vmatpush1.bf16.msra.mxu0 0
    %268 = vmatprep.subr.bf16.mxu0 0
    %269 = vmatpush1.bf16.msra.mxu0 0
    %270 = vmatprep.mubr.bf16.mxu0 0
    %271 = vmatmul.mubr.bf16.gmra.mrb[0].mxu0 %v192
    %v272 = vpop.f32.mrb[0].mxu0
    %v273 = vadd.f32 %v233, %v272
    %v274 = vpop.f32.mrb[0].mxu0
    %v275 = vpop.f32.mrb[0].mxu0
    %v276 = vpop.f32.mrb[0].mxu0
    %277 = vdwg.mxu0
    %v278 = vmax.f32 %v273, 0.0
    %v279 = vld [vmem:[%s3] sm:$0xff]
    %v280 = vld [vmem:[%s3 + $0x8] sm:$0xff]
    %v281 = vld [vmem:[%s3 + $0x10] sm:$0xff]
    %v282 = vld [vmem:[%s3 + $0x18] sm:$0xff]
    %v283 = vld [vmem:[%s3 + $0x20] sm:$0xff]
    %v284 = vld [vmem:[%s3 + $0x28] sm:$0xff]
    %v285 = vld [vmem:[%s3 + $0x30] sm:$0xff]
    %v286 = vld [vmem:[%s3 + $0x38] sm:$0xff]
    %v287 = vlaneseq
    %v288 = vshrl.u32 %v287, 7
    %v289 = vsub.s32 1, %v288
    %v290 = vrot.slane %v28, %v289
    %vm291 = vcmask 523264
    %v293 = vsel %vm291, %v278, 0
    %295 = vmatprep.subr.mxu0 0.0
    %296 = vmatpush1.msra.mxu0 %v279
    %297 = vmatprep.subr.mxu0 0.0
    %298 = vmatpush1.msra.mxu0 %v280
    %299 = vmatprep.subr.mxu0 0.0
    %300 = vmatpush1.msra.mxu0 %v281
    %301 = vmatprep.subr.mxu0 0.0
    %302 = vmatpush1.msra.mxu0 %v282
    %303 = vmatprep.subr.mxu0 0.0
    %304 = vmatpush1.msra.mxu0 %v283
    %305 = vmatprep.subr.mxu0 0.0
    %306 = vmatpush1.msra.mxu0 %v284
    %307 = vmatprep.subr.mxu0 0.0
    %308 = vmatpush1.msra.mxu0 %v285
    %309 = vmatprep.subr.mxu0 0.0
    %310 = vmatpush1.msra.mxu0 %v286
    %311 = vmatprep.subr.mxu0 0.0
    %312 = vmatpush1.msra.mxu0 0.0
    %313 = vmatprep.subr.mxu0 0.0
    %314 = vmatpush1.msra.mxu0 0.0
    %315 = vmatprep.subr.mxu0 0.0
    %316 = vmatpush1.msra.mxu0 0.0
    %317 = vmatprep.subr.mxu0 0.0
    %318 = vmatpush1.msra.mxu0 0.0
    %319 = vmatprep.subr.mxu0 0.0
    %320 = vmatpush1.msra.mxu0 0.0
    %321 = vmatprep.subr.mxu0 0.0
    %322 = vmatpush1.msra.mxu0 0.0
    %323 = vmatprep.subr.mxu0 0.0
    %324 = vmatpush1.msra.mxu0 0.0
    %325 = vmatprep.subr.mxu0 0.0
    %326 = vmatpush1.msra.mxu0 0.0
    %327 = vmatprep.subr.mxu0 0.0
    %328 = vmatpush1.msra.mxu0 0.0
    %329 = vmatprep.subr.mxu0 0.0
    %330 = vmatpush1.msra.mxu0 0.0
    %331 = vmatprep.subr.mxu0 0.0
    %332 = vmatpush1.msra.mxu0 0.0
    %333 = vmatprep.subr.mxu0 0.0
    %334 = vmatpush1.msra.mxu0 0.0
    %335 = vmatprep.subr.mxu0 0.0
    %336 = vmatpush1.msra.mxu0 0.0
    %337 = vmatprep.subr.mxu0 0.0
    %338 = vmatpush1.msra.mxu0 0.0
    %339 = vmatprep.subr.mxu0 0.0
    %340 = vmatpush1.msra.mxu0 0.0
    %341 = vmatprep.subr.mxu0 0.0
    %342 = vmatpush1.msra.mxu0 0.0
    %343 = vmatprep.subr.mxu0 0.0
    %344 = vmatpush1.msra.mxu0 0.0
    %345 = vmatprep.subr.mxu0 0.0
    %346 = vmatpush1.msra.mxu0 0.0
    %347 = vmatprep.subr.mxu0 0.0
    %348 = vmatpush1.msra.mxu0 0.0
    %349 = vmatprep.subr.mxu0 0.0
    %350 = vmatpush1.msra.mxu0 0.0
    %351 = vmatprep.subr.mxu0 0.0
    %352 = vmatpush1.msra.mxu0 0.0
    %353 = vmatprep.subr.mxu0 0.0
    %354 = vmatpush1.msra.mxu0 0.0
    %355 = vmatprep.subr.mxu0 0.0
    %356 = vmatpush1.msra.mxu0 0.0
    %357 = vmatprep.subr.mxu0 0.0
    %358 = vmatpush1.msra.mxu0 0.0
    %359 = vmatprep.mubr.f32.mxu0 0.0
    %360 = vmatmul.mubr.f32.gmra.mrb[0].mxu0 %v293
    %v361 = vpop.f32.mrb[0].mxu0
    %v362 = vadd.f32 %v290, %v361
    %v363 = vpop.f32.mrb[0].mxu0
    %364 = vdwg.mxu0
    %v365 = vmax.f32 %v362, 0.0
    %v366 = vld [vmem:[%s0] sm:$0xff]
    %v367 = vld [vmem:[%s4] sm:$0x3f]
    %v368 = vld [vmem:[%s5] sm:$0x3f]
    %vm369 = vcmask 48128
    %v371 = vsel %vm369, %v365, 0
    %v374 = vsel %vm194, %v368, 0
    %376 = vmatprep.subr.mxu0 0.0
    %377 = vmatpush1.msra.mxu0 %v374
    %378 = vmatprep.subr.mxu0 0.0
    %379 = vmatpush1.msra.mxu0 0.0
    %380 = vmatprep.subr.mxu0 0.0
    %381 = vmatpush1.msra.mxu0 0.0
    %382 = vmatprep.subr.mxu0 0.0
    %383 = vmatpush1.msra.mxu0 0.0
    %384 = vmatprep.subr.mxu0 0.0
    %385 = vmatpush1.msra.mxu0 0.0
    %386 = vmatprep.subr.mxu0 0.0
    %387 = vmatpush1.msra.mxu0 0.0
    %388 = vmatprep.subr.mxu0 0.0
    %389 = vmatpush1.msra.mxu0 0.0
    %390 = vmatprep.subr.mxu0 0.0
    %391 = vmatpush1.msra.mxu0 0.0
    %392 = vmatprep.subr.mxu0 0.0
    %393 = vmatpush1.msra.mxu0 0.0
    %394 = vmatprep.subr.mxu0 0.0
    %395 = vmatpush1.msra.mxu0 0.0
    %396 = vmatprep.subr.mxu0 0.0
    %397 = vmatpush1.msra.mxu0 0.0
    %398 = vmatprep.subr.mxu0 0.0
    %399 = vmatpush1.msra.mxu0 0.0
    %400 = vmatprep.subr.mxu0 0.0
    %401 = vmatpush1.msra.mxu0 0.0
    %402 = vmatprep.subr.mxu0 0.0
    %403 = vmatpush1.msra.mxu0 0.0
    %404 = vmatprep.subr.mxu0 0.0
    %405 = vmatpush1.msra.mxu0 0.0
    %406 = vmatprep.subr.mxu0 0.0
    %407 = vmatpush1.msra.mxu0 0.0
    %408 = vmatprep.subr.mxu0 0.0
    %409 = vmatpush1.msra.mxu0 0.0
    %410 = vmatprep.subr.mxu0 0.0
    %411 = vmatpush1.msra.mxu0 0.0
    %412 = vmatprep.subr.mxu0 0.0
    %413 = vmatpush1.msra.mxu0 0.0
    %414 = vmatprep.subr.mxu0 0.0
    %415 = vmatpush1.msra.mxu0 0.0
    %416 = vmatprep.subr.mxu0 0.0
    %417 = vmatpush1.msra.mxu0 0.0
    %418 = vmatprep.subr.mxu0 0.0
    %419 = vmatpush1.msra.mxu0 0.0
    %420 = vmatprep.subr.mxu0 0.0
    %421 = vmatpush1.msra.mxu0 0.0
    %422 = vmatprep.subr.mxu0 0.0
    %423 = vmatpush1.msra.mxu0 0.0
    %424 = vmatprep.subr.mxu0 0.0
    %425 = vmatpush1.msra.mxu0 0.0
    %426 = vmatprep.subr.mxu0 0.0
    %427 = vmatpush1.msra.mxu0 0.0
    %428 = vmatprep.subr.mxu0 0.0
    %429 = vmatpush1.msra.mxu0 0.0
    %430 = vmatprep.subr.mxu0 0.0
    %431 = vmatpush1.msra.mxu0 0.0
    %432 = vmatprep.subr.mxu0 0.0
    %433 = vmatpush1.msra.mxu0 0.0
    %434 = vmatprep.subr.mxu0 0.0
    %435 = vmatpush1.msra.mxu0 0.0
    %436 = vmatprep.subr.mxu0 0.0
    %437 = vmatpush1.msra.mxu0 0.0
    %438 = vmatprep.subr.mxu0 0.0
    %439 = vmatpush1.msra.mxu0 0.0
    %440 = vmatprep.mubr.f32.mxu0 0.0
    %441 = vmatmul.mubr.f32.gmra.mrb[0].mxu0 %v371
    %v442 = vpop.f32.mrb[0].mxu0
    %v443 = vadd.f32 0.0, %v442
    %v444 = vpop.f32.mrb[0].mxu0
    %445 = vdwg.mxu0
    %v447 = vsel %vm369, %v366, 0
    %v450 = vsel %vm194, %v367, 0
    %452 = vmatprep.subr.mxu0 0.0
    %453 = vmatpush1.msra.mxu0 %v450
    %454 = vmatprep.subr.mxu0 0.0
    %455 = vmatpush1.msra.mxu0 0.0
    %456 = vmatprep.subr.mxu0 0.0
    %457 = vmatpush1.msra.mxu0 0.0
    %458 = vmatprep.subr.mxu0 0.0
    %459 = vmatpush1.msra.mxu0 0.0
    %460 = vmatprep.subr.mxu0 0.0
    %461 = vmatpush1.msra.mxu0 0.0
    %462 = vmatprep.subr.mxu0 0.0
    %463 = vmatpush1.msra.mxu0 0.0
    %464 = vmatprep.subr.mxu0 0.0
    %465 = vmatpush1.msra.mxu0 0.0
    %466 = vmatprep.subr.mxu0 0.0
    %467 = vmatpush1.msra.mxu0 0.0
    %468 = vmatprep.subr.mxu0 0.0
    %469 = vmatpush1.msra.mxu0 0.0
    %470 = vmatprep.subr.mxu0 0.0
    %471 = vmatpush1.msra.mxu0 0.0
    %472 = vmatprep.subr.mxu0 0.0
    %473 = vmatpush1.msra.mxu0 0.0
    %474 = vmatprep.subr.mxu0 0.0
    %475 = vmatpush1.msra.mxu0 0.0
    %476 = vmatprep.subr.mxu0 0.0
    %477 = vmatpush1.msra.mxu0 0.0
    %478 = vmatprep.subr.mxu0 0.0
    %479 = vmatpush1.msra.mxu0 0.0
    %480 = vmatprep.subr.mxu0 0.0
    %481 = vmatpush1.msra.mxu0 0.0
    %482 = vmatprep.subr.mxu0 0.0
    %483 = vmatpush1.msra.mxu0 0.0
    %484 = vmatprep.subr.mxu0 0.0
    %485 = vmatpush1.msra.mxu0 0.0
    %486 = vmatprep.subr.mxu0 0.0
    %487 = vmatpush1.msra.mxu0 0.0
    %488 = vmatprep.subr.mxu0 0.0
    %489 = vmatpush1.msra.mxu0 0.0
    %490 = vmatprep.subr.mxu0 0.0
    %491 = vmatpush1.msra.mxu0 0.0
    %492 = vmatprep.subr.mxu0 0.0
    %493 = vmatpush1.msra.mxu0 0.0
    %494 = vmatprep.subr.mxu0 0.0
    %495 = vmatpush1.msra.mxu0 0.0
    %496 = vmatprep.subr.mxu0 0.0
    %497 = vmatpush1.msra.mxu0 0.0
    %498 = vmatprep.subr.mxu0 0.0
    %499 = vmatpush1.msra.mxu0 0.0
    %500 = vmatprep.subr.mxu0 0.0
    %501 = vmatpush1.msra.mxu0 0.0
    %502 = vmatprep.subr.mxu0 0.0
    %503 = vmatpush1.msra.mxu0 0.0
    %504 = vmatprep.subr.mxu0 0.0
    %505 = vmatpush1.msra.mxu0 0.0
    %506 = vmatprep.subr.mxu0 0.0
    %507 = vmatpush1.msra.mxu0 0.0
    %508 = vmatprep.subr.mxu0 0.0
    %509 = vmatpush1.msra.mxu0 0.0
    %510 = vmatprep.subr.mxu0 0.0
    %511 = vmatpush1.msra.mxu0 0.0
    %512 = vmatprep.subr.mxu0 0.0
    %513 = vmatpush1.msra.mxu0 0.0
    %514 = vmatprep.subr.mxu0 0.0
    %515 = vmatpush1.msra.mxu0 0.0
    %516 = vmatprep.mubr.f32.mxu0 0.0
    %517 = vmatmul.mubr.f32.gmra.mrb[0].mxu0 %v447
    %v518 = vpop.f32.mrb[0].mxu0
    %v519 = vadd.f32 %v443, %v518
    %v520 = vpop.f32.mrb[0].mxu0
    %521 = vdwg.mxu0
    %vm522 = vcmask 39936
    %v523 = vsel %vm522, %v519, -inf
    %524 = vmax.xlane.f32.xlu0 %v523
    %v525 = vpop.xlane.xlu0 %524
    %v526 = vsub.f32 %v519, %v525
    %v527 = vmul.f32 %v526, 1.442695
    %v528 = vpow.pop %v527
    %v529 = vsel %vm522, %v528, 0.0
    %530 = vadd.xlane.f32.xlu0 %v529
    %v531 = vpop.xlane.xlu0 %530
    %v532 = vrcp.pop %v531
    %v533 = vmul.f32 %v528, %v532
    %534 = vst.msk [vmem:[#allocation2] sm:$0xff] %vm522, %v533
    // Predicated region
    $region30: #{tpu_custom_call.1} parent=1 // pred_check
      _
    $region31: #{tpu_custom_call.1} parent=1 // pred_check_branch
      %536 = sbr.rel (0) target = $region33
    $region32: #{tpu_custom_call.1} parent=1 // pred_region
      %s538 = ssub.s32 128, 128
      %539 = vsyncadd [#allocation3], %s538
      %s541 = sshll.u32 [#allocation2], 4
      %s542 = int_to_ptr.vmem [resolvable:$true] %s541
      %544 = dma.vmem_to_hbm [thread:$0]  %s542, 128, %s7, [#allocation3]
    $region33: #{tpu_custom_call.1} parent=1 // pred_fallthru
      _
    // Predicated region
    $region34: #{tpu_custom_call.1} parent=1 // pred_check
      _
    $region35: #{tpu_custom_call.1} parent=1 // pred_check_branch
      %546 = sbr.rel (0) target = $region37
    $region36: #{tpu_custom_call.1} parent=1 // pred_region
      %547 = dma.done [#allocation3], 128
    $region37: #{tpu_custom_call.1} parent=1 // pred_fallthru
      _
    %548 = vsyncpa [#allocation3], 1

</llo_original>
